<compile_context>
chip_gen: v5e
topology: v5e:2x2
jax: 0.10.0
libtpu: 0.0.40
codegen_flags: <defaults>
</compile_context>

<pallas_src>
import jax
import jax.numpy as jnp
from jax.experimental import pallas as pl
from jax.experimental.pallas import tpu as pltpu


def _logit_scale_kernel(scale_ref, x_ref, o_ref):
    # scale_ref: (1,) f32 in SMEM -- the already-clipped logit scale.
    # x_ref / o_ref: (tM, tN) VMEM tiles with a lane-dense last dim.
    # Multiply in the native dtype (bf16 stays bf16 on the VPU).
    o_ref[...] = x_ref[...] * scale_ref[0].astype(o_ref.dtype)


_LANES = (8192, 4096, 2048, 1024, 512, 256, 128)


def _sublane_unit(itemsize: int) -> int:
    # Packed sublane tiles: f32 -> (8,128), bf16/f16 -> (16,128), int8/fp8 -> (32,128).
    return {4: 8, 2: 16, 1: 32}.get(itemsize, 8)


def _choose_2d(total: int, sub: int):
    """Pick a lane-dense 2-D slab (M, N) for `total` elements.

    Returns (M, N, padded_total).  padded_total == total whenever `total` is a
    multiple of 128; otherwise the flat array is padded up to M * N (and the
    result is sliced back) -- never a single full-extent VMEM block.
    """
    # Prefer a factorization whose row count is sublane-aligned ...
    for lane in _LANES:
        if total % lane == 0 and (total // lane) % sub == 0:
            return total // lane, lane, total
    # ... then any 128-multiple factorization (partial edge row-blocks are OK) ...
    for lane in _LANES:
        if total % lane == 0:
            return total // lane, lane, total
    # ... otherwise pad the flattened array up to a multiple of a lane width.
    lane = 128
    for cand in (4096, 2048, 1024, 512, 256):
        if total >= sub * cand:
            lane = cand
            break
    padded = pl.cdiv(total, lane) * lane
    return padded // lane, lane, padded


def _tile_dim(dim: int, unit: int, target: int) -> int:
    """Largest multiple of `unit` <= min(dim, target); full-extent if dim < unit."""
    if dim <= unit:
        return dim                      # full-extent block dim is always legal
    return max(unit, min(target, (dim // unit) * unit))


def _device_budget():
    """Return (per-buffer tile byte budget, vmem_limit_bytes, min grid blocks)."""
    kind = ""
    try:
        kind = jax.devices()[0].device_kind.lower()
    except Exception:
        pass
    if "v7" in kind:
        # 64 MiB physical VMEM, 2 TensorCores: 4 x 6 MiB buffers = 24 MiB,
        # and keep >= 2 grid blocks so both cores get fed.
        return 6 << 20, 40 << 20, 2
    if "v5" in kind and ("lite" in kind or "5e" in kind):
        # v5e: 16 MiB default scoped VMEM; 4 x 2 MiB = 8 MiB fits comfortably.
        return 2 << 20, 16 << 20, 1
    if "v6" in kind:
        # v6e: 128 MiB physical; 4 x 8 MiB = 32 MiB, raise the scoped limit.
        return 8 << 20, 64 << 20, 1
    # Unknown generation: conservative tiles, leave the scoped limit alone.
    return 2 << 20, None, 1


def learnable_logit_scaling(x, log_logit_scale, max_logit_scale: float = 100.0,
                            *, min_kernel_bytes: int = 1 << 20):
    """Pallas implementation of LearnableLogitScaling.forward."""
    orig_shape = x.shape
    total = int(x.size)
    itemsize = x.dtype.itemsize

    # clip(exp(s), max=max_logit_scale): scalar, data-independent -> hoisted.
    scale = jnp.minimum(
        jnp.exp(log_logit_scale.astype(jnp.float32)),
        jnp.float32(max_logit_scale),
    )

    # Small-tensor bypass: launch + per-step overhead dominates and plain JAX
    # lets XLA fuse this multiply into neighbouring ops.
    if total * itemsize < min_kernel_bytes:
        return x * scale.astype(x.dtype)

    sub = _sublane_unit(itemsize)
    M, N, padded_total = _choose_2d(total, sub)

    flat = x.reshape(-1)                        # contiguous reshape: free
    if padded_total != total:
        flat = jnp.pad(flat, (0, padded_total - total))
    x2 = flat.reshape(M, N)

    tile_budget, vmem_limit, min_blocks = _device_budget()
    tN = _tile_dim(N, 128, 4096)                               # lane-dense cols
    row_target = max(sub, (tile_budget // (tN * itemsize)) // sub * sub)
    tM = _tile_dim(M, sub, row_target)                         # sublane rows

    # v7x: keep at least `min_blocks` grid points so both TensorCores get work.
    if min_blocks > 1 and pl.cdiv(M, tM) * pl.cdiv(N, tN) < min_blocks:
        if tM > sub:
            tM = max(sub, ((tM // 2 + sub - 1) // sub) * sub)
        elif tN > 128:
            tN = max(128, ((tN // 2 + 127) // 128) * 128)

    grid = (pl.cdiv(M, tM), pl.cdiv(N, tN))

    out = pl.pallas_call(
        _logit_scale_kernel,
        out_shape=jax.ShapeDtypeStruct((M, N), x.dtype),
        grid_spec=pltpu.PrefetchScalarGridSpec(
            num_scalar_prefetch=0,
            grid=grid,
            in_specs=[
                # clipped scale: whole (1,) f32 array resident in SMEM
                pl.BlockSpec(memory_space=pltpu.MemorySpace.SMEM),
                # x: (tM, tN) tiles, double-buffered by the auto-pipeline
                pl.BlockSpec((tM, tN), lambda i, j: (i, j)),
            ],
            out_specs=pl.BlockSpec((tM, tN), lambda i, j: (i, j)),
        ),
        compiler_params=pltpu.CompilerParams(
            dimension_semantics=("parallel", "parallel"),
            vmem_limit_bytes=vmem_limit,
        ),
        cost_estimate=pl.CostEstimate(
            flops=padded_total,
            transcendentals=0,
            bytes_accessed=2 * padded_total * itemsize,
        ),
    )(scale.reshape(1), x2)

    out_flat = out.reshape(-1)
    if padded_total != total:
        out_flat = out_flat[:total]
    return out_flat.reshape(orig_shape)


if __name__ == "__main__":
    key = jax.random.PRNGKey(0)
    logit_scale_init = 1.0 / 0.07
    max_logit_scale = 100.0
    # the (learnable) parameter: log(logit_scale_init), a 0-d f32
    log_logit_scale = jnp.log(jnp.float32(logit_scale_init))
    scale_ref = jnp.minimum(jnp.exp(log_logit_scale), jnp.float32(max_logit_scale))

    # 1) Small shape via the fused-JAX bypass (default path for tiny tensors).
    B, S, D = 2, 8, 32                      # batch=2, seq=8, hidden=32
    x = jax.random.normal(key, (B, S, D), dtype=jnp.float32)
    y = jax.block_until_ready(
        learnable_logit_scaling(x, log_logit_scale, max_logit_scale))
    assert y.shape == x.shape and y.dtype == x.dtype
    assert jnp.allclose(y, scale_ref * x, rtol=1e-6, atol=1e-6)

    # 2) Same small shape, forcing the Pallas kernel (f32, 128-divisible total).
    y = jax.block_until_ready(
        learnable_logit_scaling(x, log_logit_scale, max_logit_scale,
                                min_kernel_bytes=0))
    assert y.shape == x.shape and y.dtype == x.dtype
    assert jnp.allclose(y, scale_ref * x, rtol=1e-6, atol=1e-6)

    # 3) bf16 input through the kernel (native-dtype multiply in-kernel).
    xb = x.astype(jnp.bfloat16)
    yb = jax.block_until_ready(
        learnable_logit_scaling(xb, log_logit_scale, max_logit_scale,
                                min_kernel_bytes=0))
    assert yb.shape == xb.shape and yb.dtype == jnp.bfloat16
    yb_ref = scale_ref.astype(jnp.bfloat16) * xb
    assert jnp.allclose(yb.astype(jnp.float32), yb_ref.astype(jnp.float32),
                        rtol=2e-2, atol=2e-2)

    # 4) Odd total (not a multiple of 128) exercising the pad-and-slice path.
    xo = jax.random.normal(jax.random.PRNGKey(0), (3, 5, 19), dtype=jnp.float32)
    yo = jax.block_until_ready(
        learnable_logit_scaling(xo, log_logit_scale, max_logit_scale,
                                min_kernel_bytes=0))
    assert yo.shape == xo.shape and yo.dtype == xo.dtype
    assert jnp.allclose(yo, scale_ref * xo, rtol=1e-6, atol=1e-6)

    print("KERNEL_OK")
</pallas_src>

<mosaic_0001>
module attributes {stable_mosaic.version = 11 : i64} {
  func.func @_logit_scale_kernel(%arg0: i32, %arg1: i32, %arg2: memref<1xf32, #tpu.memory_space<smem>>, %arg3: memref<1x512xf32, #tpu.memory_space<vmem>>, %arg4: memref<1x512xf32, #tpu.memory_space<vmem>>) attributes {dimension_semantics = [#tpu.dimension_semantics<parallel>, #tpu.dimension_semantics<parallel>], iteration_bounds = array<i64: 1, 1>, scalar_prefetch = 0 : i64, scratch_operands = 0 : i64, tpu.core_type = #tpu.core_type<tc>, window_params = [{transform_indices = @transform_0, window_bounds = array<i64: 1>}, {transform_indices = @transform_1, window_bounds = array<i64: 1, 512>}, {transform_indices = @transform_2, window_bounds = array<i64: 1, 512>}]} {
    %c0 = arith.constant 0 : index
    %c0_0 = arith.constant 0 : index
    %0 = vector.load %arg3[%c0, %c0_0] : memref<1x512xf32, #tpu.memory_space<vmem>>, vector<1x512xf32>
    %c0_1 = arith.constant 0 : index
    %1 = memref.load %arg2[%c0_1] : memref<1xf32, #tpu.memory_space<smem>>
    %2 = vector.broadcast %1 : f32 to vector<1x512xf32>
    %3 = arith.mulf %0, %2 : vector<1x512xf32>
    %c0_2 = arith.constant 0 : index
    %c0_3 = arith.constant 0 : index
    %4 = vector.load %arg4[%c0_2, %c0_3] : memref<1x512xf32, #tpu.memory_space<vmem>>, vector<1x512xf32>
    tpu.vector_store %arg4[%c0_2, %c0_3], %3 {strides = array<i32>} : memref<1x512xf32, #tpu.memory_space<vmem>>, vector<1x512xf32>,
    return
  }
  func.func @transform_0(%arg0: i32, %arg1: i32) -> i32 {
    %c0_i32 = arith.constant 0 : i32
    %c0_i32_0 = arith.constant 0 : i32
    return %c0_i32 : i32
  }
  func.func @transform_1(%arg0: i32, %arg1: i32) -> (i32, i32) {
    %c0_i32 = arith.constant 0 : i32
    return %arg0, %arg1 : i32, i32
  }
  func.func @transform_2(%arg0: i32, %arg1: i32) -> (i32, i32) {
    %c0_i32 = arith.constant 0 : i32
    return %arg0, %arg1 : i32, i32
  }
}

</mosaic_0001>

<llo_original>
// kernel: tpu_custom_call.1
$region0: #{tpu_custom_call.1}
  #allocation0 [shape = 'u32[]', space=smem, size = 0x4, offset = 0x4, fixed_abs, tag = 'smem constant byte address 0x4 - core index']
  #allocation1 [shape = 'u32[72,128]{1,0:T(1,128)}', space=vmem, size = 0x9000, scoped, tag = 'internal scratch']
  #allocation2 [shape = 'f32[1]{0:T(128)S(6)}', space=smem, size = 0x200, scoped, tag = 'scoped memory for tpu_custom_call.1']
  %s0 = inlined_call_operand.<no memory space> [shape: f32[1], index: 0, kind: input, shape index: {}]
  %s1 = inlined_call_operand.hbm [shape: f32[1,512], index: 1, kind: input, shape index: {}]
  %s2 = inlined_call_operand.hbm [shape: f32[1,512], index: 2, kind: output, shape index: {}]
  %s3 = sld [smem:[#allocation0]]
  $region22: #{tpu_custom_call.1} parent=0
    _
  %s5 = ssub.s32 1, %s3
  %s6 = scalar_select 0, %s5, %s3
  %7 = sst [smem:[#allocation2]] %s0
  $region1: #{tpu_custom_call.1} parent=0
    #allocation3 [shape = 'u8[2048]{0}', space=vmem, size = 0x800, scoped, tag = 'input window, operand 1, single buffered']
    #allocation4 [shape = 's32[1]{0}', space=sflag, size = 0x4, scoped, tag = 'scoped memory for tpu_custom_call.1']
    #allocation5 [shape = 's32[1]{0}', space=sflag, size = 0x4, scoped, tag = 'scoped memory for tpu_custom_call.1']
    #allocation6 [shape = 'u8[2048]{0}', space=vmem, size = 0x800, scoped, tag = 'output window, operand 0, single buffered']
    %8 = vsyncpa [#allocation4], 0
    %9 = vsyncpa [#allocation5], 0
    // Predicated region
    $region2: #{tpu_custom_call.1} parent=1 // pred_check
      _
    $region3: #{tpu_custom_call.1} parent=1 // pred_check_branch
      %11 = sbr.rel (0) target = $region5
    $region4: #{tpu_custom_call.1} parent=1 // pred_region
      _
    $region5: #{tpu_custom_call.1} parent=1 // pred_fallthru
      _
    // Predicated region
    $region6: #{tpu_custom_call.1} parent=1 // pred_check
      _
    $region7: #{tpu_custom_call.1} parent=1 // pred_check_branch
      %13 = sbr.rel (0) target = $region9
    $region8: #{tpu_custom_call.1} parent=1 // pred_region
      %15 = vsyncadd [#allocation4], 0
      %s17 = sshll.u32 %s1, 4
      %s18 = int_to_ptr.hbm [resolvable:$true] %s17
      %s19 = sshll.u32 [#allocation3], 4
      %s20 = int_to_ptr.vmem [resolvable:$true] %s19
      %22 = dma.hbm_to_vmem [thread:$0]  %s18, 64, %s20, [#allocation4]
    $region9: #{tpu_custom_call.1} parent=1 // pred_fallthru
      _
    // Predicated region
    $region10: #{tpu_custom_call.1} parent=1 // pred_check
      _
    $region11: #{tpu_custom_call.1} parent=1 // pred_check_branch
      %24 = sbr.rel (0) target = $region13
    $region12: #{tpu_custom_call.1} parent=1 // pred_region
      %26 = dma.done [#allocation4], 64
    $region13: #{tpu_custom_call.1} parent=1 // pred_fallthru
      _
    %v27 = vld [vmem:[#allocation3] sm:$0xf]
    %s28 = sld [smem:[#allocation2]]
    %v29 = vstv %s28
    %v30 = vmul.f32 %v27, %v29
    %v31 = vlaneseq
    %vm32 = vcmp.ge.s32.totalorder %v31, 0
    %vm33 = vcmp.lt.s32.totalorder %v31, 512
    %vm34 = vmand %vm32, %vm33
    %35 = vst.msk [vmem:[#allocation6] sm:$0xf] %vm34, %v30
    // Predicated region
    $region14: #{tpu_custom_call.1} parent=1 // pred_check
      _
    $region15: #{tpu_custom_call.1} parent=1 // pred_check_branch
      %37 = sbr.rel (0) target = $region17
    $region16: #{tpu_custom_call.1} parent=1 // pred_region
      %39 = vsyncadd [#allocation5], 0
      %s41 = sshll.u32 [#allocation6], 4
      %s42 = int_to_ptr.vmem [resolvable:$true] %s41
      %s43 = sshll.u32 %s2, 4
      %s44 = int_to_ptr.hbm [resolvable:$true] %s43
      %46 = dma.vmem_to_hbm [thread:$0]  %s42, 64, %s44, [#allocation5]
    $region17: #{tpu_custom_call.1} parent=1 // pred_fallthru
      _
    // Predicated region
    $region18: #{tpu_custom_call.1} parent=1 // pred_check
      _
    $region19: #{tpu_custom_call.1} parent=1 // pred_check_branch
      %48 = sbr.rel (0) target = $region21
    $region20: #{tpu_custom_call.1} parent=1 // pred_region
      %50 = dma.done [#allocation5], 64
    $region21: #{tpu_custom_call.1} parent=1 // pred_fallthru
      _
    %51 = vsyncpa [#allocation4], 1
    %52 = vsyncpa [#allocation5], 1

</llo_original>
